<compile_context>
chip_gen: v6e
topology: v6e:2x2x1
jax: 0.10.0
libtpu: 0.0.40
codegen_flags: <defaults>
</compile_context>

<pallas_src>
import jax
import jax.numpy as jnp
from jax.experimental import pallas as pl
from jax.experimental.pallas import tpu as pltpu


# ----------------------------------------------------------------------------
# Fused kernel: conv(k=2)+ReLU+avgpool for both text heads, category Linear,
# concat, BatchNorm1d (train mode), inter_dense, final_dense.
# ----------------------------------------------------------------------------
def three_inputs_net_kernel(
    title_pair_ref, full_pair_ref,     # (B*(L1-1), 2H), (B*(L2-1), 2H)
    title_pool_ref, full_pool_ref,     # (B, B*(L1-1)),  (B, B*(L2-1))
    cat_ref,                           # (B, C)
    wt_ref, bt_ref,                    # title conv taps stacked: (2H, H), (1, H)
    wfu_ref, bfu_ref,                  # full  conv taps stacked: (2H, H), (1, H)
    wc_ref, bc_ref,                    # category_out Linear: (C, H), (1, H)
    gamma_ref, beta_ref,               # BatchNorm1d affine: (1, 3H) each
    wi_ref, bi_ref,                    # inter_dense: (3H, 2H), (1, 2H)
    wo_ref, bo_ref,                    # final_dense: (1, 2H), (1, 1)
    out_ref,                           # (B, 1)
):
    f32 = jnp.float32

    # --- title head: fused 2-tap conv (single matmul) + ReLU + mean pool -----
    yt = jnp.dot(title_pair_ref[...], wt_ref[...],
                 preferred_element_type=f32) + bt_ref[...]       # (B*(L1-1), H)
    yt = jnp.maximum(yt, 0.0)
    title = jnp.dot(title_pool_ref[...], yt,
                    preferred_element_type=f32)                  # (B, H)

    # --- full head ------------------------------------------------------------
    yf = jnp.dot(full_pair_ref[...], wfu_ref[...],
                 preferred_element_type=f32) + bfu_ref[...]      # (B*(L2-1), H)
    yf = jnp.maximum(yf, 0.0)
    full = jnp.dot(full_pool_ref[...], yf,
                   preferred_element_type=f32)                   # (B, H)

    # --- category Linear ------------------------------------------------------
    cat = jnp.dot(cat_ref[...], wc_ref[...],
                  preferred_element_type=f32) + bc_ref[...]      # (B, H)

    # --- concat + BatchNorm1d (training mode: batch stats, biased var) --------
    concat = jnp.concatenate([title, full, cat], axis=1)         # (B, 3H)
    mean = jnp.mean(concat, axis=0, keepdims=True)
    var = jnp.mean((concat - mean) ** 2, axis=0, keepdims=True)
    bn = (concat - mean) * jax.lax.rsqrt(var + 1e-5)
    bn = bn * gamma_ref[...] + beta_ref[...]

    # --- inter_dense ----------------------------------------------------------
    h = jnp.dot(bn, wi_ref[...], preferred_element_type=f32) + bi_ref[...]  # (B, 2H)

    # --- final_dense (out_features=1): VPU multiply + lane reduction ----------
    out_ref[...] = jnp.sum(h * wo_ref[...], axis=-1, keepdims=True) + bo_ref[...]


# ----------------------------------------------------------------------------
# Host-side wrapper: embedding gather + tap-pair layout + pooling matrices,
# then a single pallas_call with everything resident in VMEM.
# ----------------------------------------------------------------------------
def three_inputs_net_forward(params, input1, input2, input3):
    B, L1 = input1.shape
    _, L2 = input2.shape
    H = params["title_emb"].shape[1]

    # Embedding gather + (x[l], x[l+1]) pair layout done host-side; XLA fuses
    # the slice/concat/reshape into the gather so the kernel never takes
    # unaligned (L-1) sublane slices.
    # TODO(synk): at large n_tokens/L, move this gather in-kernel (scalar
    # prefetched ids + DMA gather from an HBM-resident table) to avoid the
    # HBM round-trip of the gathered activations.
    def make_pair(table, ids, L):
        emb = jnp.take(table, ids, axis=0)                               # (B, L, H)
        pair = jnp.concatenate([emb[:, :-1, :], emb[:, 1:, :]], axis=-1)  # (B, L-1, 2H)
        return pair.reshape(B * (L - 1), 2 * H)

    title_pair = make_pair(params["title_emb"], input1, L1)
    full_pair = make_pair(params["full_emb"], input2, L2)

    # Segment-mean pooling matrices (B, B*(L-1)): AdaptiveAvgPool1d(1) as one
    # small matmul, no in-kernel reshapes.
    def pool_mat(L):
        return jnp.kron(jnp.eye(B, dtype=jnp.float32),
                        jnp.full((1, L - 1), 1.0 / (L - 1), jnp.float32))

    title_pool = pool_mat(L1)
    full_pool = pool_mat(L2)

    vmem = pl.BlockSpec(memory_space=pltpu.MemorySpace.VMEM)
    return pl.pallas_call(
        three_inputs_net_kernel,
        out_shape=jax.ShapeDtypeStruct((B, 1), jnp.float32),
        in_specs=[vmem] * 17,
        out_specs=vmem,
    )(title_pair, full_pair, title_pool, full_pool, input3,
      params["title_w"], params["title_b"],
      params["full_w"], params["full_b"],
      params["cat_w"], params["cat_b"],
      params["bn_gamma"], params["bn_beta"],
      params["inter_w"], params["inter_b"],
      params["final_w_row"], params["final_b"])


# ----------------------------------------------------------------------------
# Pure-JAX reference for verification (same math, plain XLA).
# ----------------------------------------------------------------------------
def reference_forward(params, input1, input2, input3):
    H = params["title_emb"].shape[1]

    def conv_pool(table, ids, W, b):
        emb = jnp.take(table, ids, axis=0)                     # (B, L, H)
        y = emb[:, :-1, :] @ W[:H] + emb[:, 1:, :] @ W[H:] + b
        y = jnp.maximum(y, 0.0)
        return jnp.mean(y, axis=1)                             # (B, H)

    t = conv_pool(params["title_emb"], input1, params["title_w"], params["title_b"])
    f = conv_pool(params["full_emb"], input2, params["full_w"], params["full_b"])
    c = input3 @ params["cat_w"] + params["cat_b"]
    concat = jnp.concatenate([t, f, c], axis=1)
    mean = jnp.mean(concat, axis=0, keepdims=True)
    var = jnp.mean((concat - mean) ** 2, axis=0, keepdims=True)
    bn = (concat - mean) * jax.lax.rsqrt(var + 1e-5)
    bn = bn * params["bn_gamma"] + params["bn_beta"]
    h = bn @ params["inter_w"] + params["inter_b"]
    return jnp.sum(h * params["final_w_row"], axis=-1, keepdims=True) + params["final_b"]


def init_params(key, n_tokens, n_cat_features, hid_size):
    ks = jax.random.split(key, 16)
    f32 = jnp.float32
    H = hid_size
    concat_feats = 3 * H
    return {
        "title_emb": 0.1 * jax.random.normal(ks[0], (n_tokens, H), f32),
        "full_emb": 0.1 * jax.random.normal(ks[1], (n_tokens, H), f32),
        # Conv1d(H, H, kernel_size=2): both taps pre-transposed to (in, out)
        # and stacked vertically into a single (2H, H) matrix.
        "title_w": 0.1 * jax.random.normal(ks[2], (2 * H, H), f32),
        "title_b": 0.1 * jax.random.normal(ks[3], (1, H), f32),
        "full_w": 0.1 * jax.random.normal(ks[4], (2 * H, H), f32),
        "full_b": 0.1 * jax.random.normal(ks[5], (1, H), f32),
        # category_out Linear: (in=C, out=H) pre-transposed
        "cat_w": 0.1 * jax.random.normal(ks[6], (n_cat_features, H), f32),
        "cat_b": 0.1 * jax.random.normal(ks[7], (1, H), f32),
        # BatchNorm1d affine params
        "bn_gamma": 1.0 + 0.1 * jax.random.normal(ks[8], (1, concat_feats), f32),
        "bn_beta": 0.1 * jax.random.normal(ks[9], (1, concat_feats), f32),
        # inter_dense: (3H, 2H); final_dense weight stored as a (1, 2H) row
        "inter_w": 0.1 * jax.random.normal(ks[10], (concat_feats, 2 * H), f32),
        "inter_b": 0.1 * jax.random.normal(ks[11], (1, 2 * H), f32),
        "final_w_row": 0.1 * jax.random.normal(ks[12], (1, 2 * H), f32),
        "final_b": 0.1 * jax.random.normal(ks[13], (1, 1), f32),
    }


if __name__ == "__main__":
    # Small, deterministic shapes consistent with the module's forward.
    B = 8             # batch (full sublane group)
    L1 = 8            # title sequence length
    L2 = 12           # full-text sequence length
    H = 64            # hid_size (module default); 2H = 128 -> lane-dense matmuls
    N_TOKENS = 64
    N_CAT = 16

    key = jax.random.PRNGKey(0)
    kp, k1, k2, k3 = jax.random.split(key, 4)

    params = init_params(kp, N_TOKENS, N_CAT, H)

    input1 = jax.random.randint(k1, (B, L1), 0, N_TOKENS, dtype=jnp.int32)
    input2 = jax.random.randint(k2, (B, L2), 0, N_TOKENS, dtype=jnp.int32)
    input3 = jax.random.normal(k3, (B, N_CAT), jnp.float32)

    fwd = jax.jit(three_inputs_net_forward)
    out = jax.block_until_ready(fwd(params, input1, input2, input3))

    ref = jax.block_until_ready(
        reference_forward(params, input1, input2, input3))

    assert out.shape == (B, 1)
    assert jnp.allclose(out, ref, atol=1e-3, rtol=1e-3), (out, ref)

    print("KERNEL_OK")
</pallas_src>

<mosaic_0001>
module attributes {stable_mosaic.version = 11 : i64} {
  func.func @three_inputs_net_kernel(%arg0: memref<56x128xf32, #tpu.memory_space<vmem>>, %arg1: memref<88x128xf32, #tpu.memory_space<vmem>>, %arg2: memref<8x56xf32, #tpu.memory_space<vmem>>, %arg3: memref<8x88xf32, #tpu.memory_space<vmem>>, %arg4: memref<8x16xf32, #tpu.memory_space<vmem>>, %arg5: memref<128x64xf32, #tpu.memory_space<vmem>>, %arg6: memref<1x64xf32, #tpu.memory_space<vmem>>, %arg7: memref<128x64xf32, #tpu.memory_space<vmem>>, %arg8: memref<1x64xf32, #tpu.memory_space<vmem>>, %arg9: memref<16x64xf32, #tpu.memory_space<vmem>>, %arg10: memref<1x64xf32, #tpu.memory_space<vmem>>, %arg11: memref<1x192xf32, #tpu.memory_space<vmem>>, %arg12: memref<1x192xf32, #tpu.memory_space<vmem>>, %arg13: memref<192x128xf32, #tpu.memory_space<vmem>>, %arg14: memref<1x128xf32, #tpu.memory_space<vmem>>, %arg15: memref<1x128xf32, #tpu.memory_space<vmem>>, %arg16: memref<1x1xf32, #tpu.memory_space<vmem>>, %arg17: memref<8x1xf32, #tpu.memory_space<vmem>>) attributes {dimension_semantics = [], scalar_prefetch = 0 : i64, scratch_operands = 0 : i64, tpu.core_type = #tpu.core_type<tc>} {
    %c0 = arith.constant 0 : index
    %c0_0 = arith.constant 0 : index
    %0 = vector.load %arg0[%c0, %c0_0] : memref<56x128xf32, #tpu.memory_space<vmem>>, vector<56x128xf32>
    %c0_1 = arith.constant 0 : index
    %c0_2 = arith.constant 0 : index
    %1 = vector.load %arg5[%c0_1, %c0_2] : memref<128x64xf32, #tpu.memory_space<vmem>>, vector<128x64xf32>
    %cst = arith.constant dense<0.000000e+00> : vector<56x64xf32>
    %2 = tpu.matmul %0, %1, %cst {dimension_numbers = #tpu.dot_dimension_numbers<[1], [0], [0], [1], [0, 0, 1, 1], [], []>} : vector<56x128xf32>, vector<128x64xf32>, vector<56x64xf32> -> vector<56x64xf32>
    %c0_3 = arith.constant 0 : index
    %c0_4 = arith.constant 0 : index
    %3 = vector.load %arg6[%c0_3, %c0_4] : memref<1x64xf32, #tpu.memory_space<vmem>>, vector<1x64xf32>
    %4 = vector.broadcast %3 : vector<1x64xf32> to vector<56x64xf32>
    %5 = arith.addf %2, %4 : vector<56x64xf32>
    %cst_5 = arith.constant 0.000000e+00 : f32
    %6 = vector.broadcast %cst_5 : f32 to vector<56x64xf32>
    %7 = arith.maximumf %5, %6 : vector<56x64xf32>
    %c0_6 = arith.constant 0 : index
    %c0_7 = arith.constant 0 : index
    %8 = vector.load %arg2[%c0_6, %c0_7] : memref<8x56xf32, #tpu.memory_space<vmem>>, vector<8x56xf32>
    %cst_8 = arith.constant dense<0.000000e+00> : vector<8x64xf32>
    %9 = tpu.matmul %8, %7, %cst_8 {dimension_numbers = #tpu.dot_dimension_numbers<[1], [0], [0], [1], [0, 0, 1, 1], [], []>} : vector<8x56xf32>, vector<56x64xf32>, vector<8x64xf32> -> vector<8x64xf32>
    %c0_9 = arith.constant 0 : index
    %c0_10 = arith.constant 0 : index
    %10 = vector.load %arg1[%c0_9, %c0_10] : memref<88x128xf32, #tpu.memory_space<vmem>>, vector<88x128xf32>
    %c0_11 = arith.constant 0 : index
    %c0_12 = arith.constant 0 : index
    %11 = vector.load %arg7[%c0_11, %c0_12] : memref<128x64xf32, #tpu.memory_space<vmem>>, vector<128x64xf32>
    %cst_13 = arith.constant dense<0.000000e+00> : vector<88x64xf32>
    %12 = tpu.matmul %10, %11, %cst_13 {dimension_numbers = #tpu.dot_dimension_numbers<[1], [0], [0], [1], [0, 0, 1, 1], [], []>} : vector<88x128xf32>, vector<128x64xf32>, vector<88x64xf32> -> vector<88x64xf32>
    %c0_14 = arith.constant 0 : index
    %c0_15 = arith.constant 0 : index
    %13 = vector.load %arg8[%c0_14, %c0_15] : memref<1x64xf32, #tpu.memory_space<vmem>>, vector<1x64xf32>
    %14 = vector.broadcast %13 : vector<1x64xf32> to vector<88x64xf32>
    %15 = arith.addf %12, %14 : vector<88x64xf32>
    %cst_16 = arith.constant 0.000000e+00 : f32
    %16 = vector.broadcast %cst_16 : f32 to vector<88x64xf32>
    %17 = arith.maximumf %15, %16 : vector<88x64xf32>
    %c0_17 = arith.constant 0 : index
    %c0_18 = arith.constant 0 : index
    %18 = vector.load %arg3[%c0_17, %c0_18] : memref<8x88xf32, #tpu.memory_space<vmem>>, vector<8x88xf32>
    %cst_19 = arith.constant dense<0.000000e+00> : vector<8x64xf32>
    %19 = tpu.matmul %18, %17, %cst_19 {dimension_numbers = #tpu.dot_dimension_numbers<[1], [0], [0], [1], [0, 0, 1, 1], [], []>} : vector<8x88xf32>, vector<88x64xf32>, vector<8x64xf32> -> vector<8x64xf32>
    %c0_20 = arith.constant 0 : index
    %c0_21 = arith.constant 0 : index
    %20 = vector.load %arg4[%c0_20, %c0_21] : memref<8x16xf32, #tpu.memory_space<vmem>>, vector<8x16xf32>
    %c0_22 = arith.constant 0 : index
    %c0_23 = arith.constant 0 : index
    %21 = vector.load %arg9[%c0_22, %c0_23] : memref<16x64xf32, #tpu.memory_space<vmem>>, vector<16x64xf32>
    %cst_24 = arith.constant dense<0.000000e+00> : vector<8x64xf32>
    %22 = tpu.matmul %20, %21, %cst_24 {dimension_numbers = #tpu.dot_dimension_numbers<[1], [0], [0], [1], [0, 0, 1, 1], [], []>} : vector<8x16xf32>, vector<16x64xf32>, vector<8x64xf32> -> vector<8x64xf32>
    %c0_25 = arith.constant 0 : index
    %c0_26 = arith.constant 0 : index
    %23 = vector.load %arg10[%c0_25, %c0_26] : memref<1x64xf32, #tpu.memory_space<vmem>>, vector<1x64xf32>
    %24 = vector.broadcast %23 : vector<1x64xf32> to vector<8x64xf32>
    %25 = arith.addf %22, %24 : vector<8x64xf32>
    %26 = tpu.concatenate %9, %19, %25 in 1 : vector<8x64xf32>, vector<8x64xf32>, vector<8x64xf32> -> vector<8x192xf32>
    %cst_27 = arith.constant dense<0.000000e+00> : vector<192xf32>
    %27 = vector.multi_reduction <add>, %26, %cst_27 [0] : vector<8x192xf32> to vector<192xf32>
    %28 = vector.shape_cast %27 : vector<192xf32> to vector<1x192xf32>
    %cst_28 = arith.constant 8.000000e+00 : f32
    %29 = vector.broadcast %cst_28 : f32 to vector<1x192xf32>
    %30 = arith.divf %28, %29 : vector<1x192xf32>
    %31 = vector.broadcast %30 : vector<1x192xf32> to vector<8x192xf32>
    %32 = arith.subf %26, %31 : vector<8x192xf32>
    %33 = arith.mulf %32, %32 : vector<8x192xf32>
    %cst_29 = arith.constant dense<0.000000e+00> : vector<192xf32>
    %34 = vector.multi_reduction <add>, %33, %cst_29 [0] : vector<8x192xf32> to vector<192xf32>
    %35 = vector.shape_cast %34 : vector<192xf32> to vector<1x192xf32>
    %cst_30 = arith.constant 8.000000e+00 : f32
    %36 = vector.broadcast %cst_30 : f32 to vector<1x192xf32>
    %37 = arith.divf %35, %36 : vector<1x192xf32>
    %38 = vector.broadcast %30 : vector<1x192xf32> to vector<8x192xf32>
    %39 = arith.subf %26, %38 : vector<8x192xf32>
    %cst_31 = arith.constant 9.99999974E-6 : f32
    %40 = vector.broadcast %cst_31 : f32 to vector<1x192xf32>
    %41 = arith.addf %37, %40 : vector<1x192xf32>
    %42 = math.rsqrt %41 : vector<1x192xf32>
    %43 = vector.broadcast %42 : vector<1x192xf32> to vector<8x192xf32>
    %44 = arith.mulf %39, %43 : vector<8x192xf32>
    %c0_32 = arith.constant 0 : index
    %c0_33 = arith.constant 0 : index
    %45 = vector.load %arg11[%c0_32, %c0_33] : memref<1x192xf32, #tpu.memory_space<vmem>>, vector<1x192xf32>
    %46 = vector.broadcast %45 : vector<1x192xf32> to vector<8x192xf32>
    %47 = arith.mulf %44, %46 : vector<8x192xf32>
    %c0_34 = arith.constant 0 : index
    %c0_35 = arith.constant 0 : index
    %48 = vector.load %arg12[%c0_34, %c0_35] : memref<1x192xf32, #tpu.memory_space<vmem>>, vector<1x192xf32>
    %49 = vector.broadcast %48 : vector<1x192xf32> to vector<8x192xf32>
    %50 = arith.addf %47, %49 : vector<8x192xf32>
    %c0_36 = arith.constant 0 : index
    %c0_37 = arith.constant 0 : index
    %51 = vector.load %arg13[%c0_36, %c0_37] : memref<192x128xf32, #tpu.memory_space<vmem>>, vector<192x128xf32>
    %cst_38 = arith.constant dense<0.000000e+00> : vector<8x128xf32>
    %52 = tpu.matmul %50, %51, %cst_38 {dimension_numbers = #tpu.dot_dimension_numbers<[1], [0], [0], [1], [0, 0, 1, 1], [], []>} : vector<8x192xf32>, vector<192x128xf32>, vector<8x128xf32> -> vector<8x128xf32>
    %c0_39 = arith.constant 0 : index
    %c0_40 = arith.constant 0 : index
    %53 = vector.load %arg14[%c0_39, %c0_40] : memref<1x128xf32, #tpu.memory_space<vmem>>, vector<1x128xf32>
    %54 = vector.broadcast %53 : vector<1x128xf32> to vector<8x128xf32>
    %55 = arith.addf %52, %54 : vector<8x128xf32>
    %c0_41 = arith.constant 0 : index
    %c0_42 = arith.constant 0 : index
    %56 = vector.load %arg15[%c0_41, %c0_42] : memref<1x128xf32, #tpu.memory_space<vmem>>, vector<1x128xf32>
    %57 = vector.broadcast %56 : vector<1x128xf32> to vector<8x128xf32>
    %58 = arith.mulf %55, %57 : vector<8x128xf32>
    %cst_43 = arith.constant dense<0.000000e+00> : vector<8xf32>
    %59 = vector.multi_reduction <add>, %58, %cst_43 [1] : vector<8x128xf32> to vector<8xf32>
    %60 = vector.shape_cast %59 : vector<8xf32> to vector<8x1xf32>
    %c0_44 = arith.constant 0 : index
    %c0_45 = arith.constant 0 : index
    %61 = vector.load %arg16[%c0_44, %c0_45] : memref<1x1xf32, #tpu.memory_space<vmem>>, vector<1x1xf32>
    %62 = vector.broadcast %61 : vector<1x1xf32> to vector<8x1xf32>
    %63 = arith.addf %60, %62 : vector<8x1xf32>
    %c0_46 = arith.constant 0 : index
    %c0_47 = arith.constant 0 : index
    %64 = vector.load %arg17[%c0_46, %c0_47] : memref<8x1xf32, #tpu.memory_space<vmem>>, vector<8x1xf32>
    tpu.vector_store %arg17[%c0_46, %c0_47], %63 {strides = array<i32>} : memref<8x1xf32, #tpu.memory_space<vmem>>, vector<8x1xf32>,
    return
  }
}

</mosaic_0001>

<llo_original>
// kernel: three_inputs_net_forward.1
$region0: #{three_inputs_net_forward.1}
  #allocation0 [shape = 'u32[]', space=smem, size = 0x4, offset = 0x4, fixed_abs, tag = 'smem constant byte address 0x4 - core index']
  #allocation1 [shape = 'u32[144,128]{1,0:T(1,128)}', space=vmem, size = 0x12000, scoped, tag = 'internal scratch']
  #allocation2 [shape = 'f32[1,1]{1,0:T(1,128)S(1)}', space=vmem, size = 0x200, scoped, tag = 'scoped memory for three_inputs_net_forward.1']
  %s0 = inlined_call_operand.vmem [shape: f32[56,128], index: 0, kind: input, shape index: {}]
  %s1 = inlined_call_operand.vmem [shape: f32[88,128], index: 1, kind: input, shape index: {}]
  %s2 = inlined_call_operand.vmem [shape: f32[8,56], index: 2, kind: input, shape index: {}]
  %s3 = inlined_call_operand.vmem [shape: f32[8,88], index: 3, kind: input, shape index: {}]
  %s4 = inlined_call_operand.vmem [shape: f32[8,16], index: 4, kind: input, shape index: {}]
  %s5 = inlined_call_operand.vmem [shape: f32[128,64], index: 5, kind: input, shape index: {}]
  %s6 = inlined_call_operand.vmem [shape: f32[1,64], index: 6, kind: input, shape index: {}]
  %s7 = inlined_call_operand.vmem [shape: f32[128,64], index: 7, kind: input, shape index: {}]
  %s8 = inlined_call_operand.vmem [shape: f32[1,64], index: 8, kind: input, shape index: {}]
  %s9 = inlined_call_operand.vmem [shape: f32[16,64], index: 9, kind: input, shape index: {}]
  %s10 = inlined_call_operand.vmem [shape: f32[1,64], index: 10, kind: input, shape index: {}]
  %s11 = inlined_call_operand.vmem [shape: f32[1,192], index: 11, kind: input, shape index: {}]
  %s12 = inlined_call_operand.vmem [shape: f32[1,192], index: 12, kind: input, shape index: {}]
  %s13 = inlined_call_operand.vmem [shape: f32[192,128], index: 13, kind: input, shape index: {}]
  %s14 = inlined_call_operand.vmem [shape: f32[1,128], index: 14, kind: input, shape index: {}]
  %s15 = inlined_call_operand.vmem [shape: f32[1,128], index: 15, kind: input, shape index: {}]
  %s16 = inlined_call_operand.<no memory space> [shape: f32[1,1], index: 16, kind: input, shape index: {}]
  %s17 = inlined_call_operand.vmem [shape: f32[8,1], index: 17, kind: output, shape index: {}]
  %s18 = sld [smem:[#allocation0]]
  $region78: #{three_inputs_net_forward.1} parent=0
    _
  %s20 = ssub.s32 1, %s18
  %s21 = scalar_select 0, %s20, %s18
  %v22 = vstv %s16
  %23 = vst [vmem:[#allocation2] sm:$0x1] %v22
  // Predicated region
  $region2: #{three_inputs_net_forward.1} parent=0 // pred_check
    _
  $region3: #{three_inputs_net_forward.1} parent=0 // pred_check_branch
    %25 = sbr.rel (0) target = $region5
  $region4: #{three_inputs_net_forward.1} parent=0 // pred_region
    _
  $region5: #{three_inputs_net_forward.1} parent=0 // pred_fallthru
    _
  // Predicated region
  $region6: #{three_inputs_net_forward.1} parent=0 // pred_check
    _
  $region7: #{three_inputs_net_forward.1} parent=0 // pred_check_branch
    %27 = sbr.rel (0) target = $region9
  $region8: #{three_inputs_net_forward.1} parent=0 // pred_region
    _
  $region9: #{three_inputs_net_forward.1} parent=0 // pred_fallthru
    _
  // Predicated region
  $region10: #{three_inputs_net_forward.1} parent=0 // pred_check
    _
  $region11: #{three_inputs_net_forward.1} parent=0 // pred_check_branch
    %29 = sbr.rel (0) target = $region13
  $region12: #{three_inputs_net_forward.1} parent=0 // pred_region
    _
  $region13: #{three_inputs_net_forward.1} parent=0 // pred_fallthru
    _
  // Predicated region
  $region14: #{three_inputs_net_forward.1} parent=0 // pred_check
    _
  $region15: #{three_inputs_net_forward.1} parent=0 // pred_check_branch
    %31 = sbr.rel (0) target = $region17
  $region16: #{three_inputs_net_forward.1} parent=0 // pred_region
    _
  $region17: #{three_inputs_net_forward.1} parent=0 // pred_fallthru
    _
  // Predicated region
  $region18: #{three_inputs_net_forward.1} parent=0 // pred_check
    _
  $region19: #{three_inputs_net_forward.1} parent=0 // pred_check_branch
    %33 = sbr.rel (0) target = $region21
  $region20: #{three_inputs_net_forward.1} parent=0 // pred_region
    _
  $region21: #{three_inputs_net_forward.1} parent=0 // pred_fallthru
    _
  // Predicated region
  $region22: #{three_inputs_net_forward.1} parent=0 // pred_check
    _
  $region23: #{three_inputs_net_forward.1} parent=0 // pred_check_branch
    %35 = sbr.rel (0) target = $region25
  $region24: #{three_inputs_net_forward.1} parent=0 // pred_region
    _
  $region25: #{three_inputs_net_forward.1} parent=0 // pred_fallthru
    _
  // Predicated region
  $region26: #{three_inputs_net_forward.1} parent=0 // pred_check
    _
  $region27: #{three_inputs_net_forward.1} parent=0 // pred_check_branch
    %37 = sbr.rel (0) target = $region29
  $region28: #{three_inputs_net_forward.1} parent=0 // pred_region
    _
  $region29: #{three_inputs_net_forward.1} parent=0 // pred_fallthru
    _
  // Predicated region
  $region30: #{three_inputs_net_forward.1} parent=0 // pred_check
    _
  $region31: #{three_inputs_net_forward.1} parent=0 // pred_check_branch
    %39 = sbr.rel (0) target = $region33
  $region32: #{three_inputs_net_forward.1} parent=0 // pred_region
    _
  $region33: #{three_inputs_net_forward.1} parent=0 // pred_fallthru
    _
  // Predicated region
  $region34: #{three_inputs_net_forward.1} parent=0 // pred_check
    _
  $region35: #{three_inputs_net_forward.1} parent=0 // pred_check_branch
    %41 = sbr.rel (0) target = $region37
  $region36: #{three_inputs_net_forward.1} parent=0 // pred_region
    _
  $region37: #{three_inputs_net_forward.1} parent=0 // pred_fallthru
    _
  // Predicated region
  $region38: #{three_inputs_net_forward.1} parent=0 // pred_check
    _
  $region39: #{three_inputs_net_forward.1} parent=0 // pred_check_branch
    %43 = sbr.rel (0) target = $region41
  $region40: #{three_inputs_net_forward.1} parent=0 // pred_region
    _
  $region41: #{three_inputs_net_forward.1} parent=0 // pred_fallthru
    _
  // Predicated region
  $region42: #{three_inputs_net_forward.1} parent=0 // pred_check
    _
  $region43: #{three_inputs_net_forward.1} parent=0 // pred_check_branch
    %45 = sbr.rel (0) target = $region45
  $region44: #{three_inputs_net_forward.1} parent=0 // pred_region
    _
  $region45: #{three_inputs_net_forward.1} parent=0 // pred_fallthru
    _
  // Predicated region
  $region46: #{three_inputs_net_forward.1} parent=0 // pred_check
    _
  $region47: #{three_inputs_net_forward.1} parent=0 // pred_check_branch
    %47 = sbr.rel (0) target = $region49
  $region48: #{three_inputs_net_forward.1} parent=0 // pred_region
    _
  $region49: #{three_inputs_net_forward.1} parent=0 // pred_fallthru
    _
  // Predicated region
  $region50: #{three_inputs_net_forward.1} parent=0 // pred_check
    _
  $region51: #{three_inputs_net_forward.1} parent=0 // pred_check_branch
    %49 = sbr.rel (0) target = $region53
  $region52: #{three_inputs_net_forward.1} parent=0 // pred_region
    _
  $region53: #{three_inputs_net_forward.1} parent=0 // pred_fallthru
    _
  // Predicated region
  $region54: #{three_inputs_net_forward.1} parent=0 // pred_check
    _
  $region55: #{three_inputs_net_forward.1} parent=0 // pred_check_branch
    %51 = sbr.rel (0) target = $region57
  $region56: #{three_inputs_net_forward.1} parent=0 // pred_region
    _
  $region57: #{three_inputs_net_forward.1} parent=0 // pred_fallthru
    _
  // Predicated region
  $region58: #{three_inputs_net_forward.1} parent=0 // pred_check
    _
  $region59: #{three_inputs_net_forward.1} parent=0 // pred_check_branch
    %53 = sbr.rel (0) target = $region61
  $region60: #{three_inputs_net_forward.1} parent=0 // pred_region
    _
  $region61: #{three_inputs_net_forward.1} parent=0 // pred_fallthru
    _
  // Predicated region
  $region62: #{three_inputs_net_forward.1} parent=0 // pred_check
    _
  $region63: #{three_inputs_net_forward.1} parent=0 // pred_check_branch
    %55 = sbr.rel (0) target = $region65
  $region64: #{three_inputs_net_forward.1} parent=0 // pred_region
    _
  $region65: #{three_inputs_net_forward.1} parent=0 // pred_fallthru
    _
  // Predicated region
  $region66: #{three_inputs_net_forward.1} parent=0 // pred_check
    _
  $region67: #{three_inputs_net_forward.1} parent=0 // pred_check_branch
    %57 = sbr.rel (0) target = $region69
  $region68: #{three_inputs_net_forward.1} parent=0 // pred_region
    _
  $region69: #{three_inputs_net_forward.1} parent=0 // pred_fallthru
    _
  %v58 = vld [vmem:[%s0] sm:$0xff]
  %v59 = vld [vmem:[%s0 + $0x8] sm:$0xff]
  %v60 = vld [vmem:[%s0 + $0x10] sm:$0xff]
  %v61 = vld [vmem:[%s0 + $0x18] sm:$0xff]
  %v62 = vld [vmem:[%s0 + $0x20] sm:$0xff]
  %v63 = vld [vmem:[%s0 + $0x28] sm:$0xff]
  %v64 = vld [vmem:[%s0 + $0x30] sm:$0xff]
  %v65 = vld [vmem:[%s5] sm:$0xff]
  %v66 = vld [vmem:[%s5 + $0x8] sm:$0xff]
  %v67 = vld [vmem:[%s5 + $0x10] sm:$0xff]
  %v68 = vld [vmem:[%s5 + $0x18] sm:$0xff]
  %v69 = vld [vmem:[%s5 + $0x20] sm:$0xff]
  %v70 = vld [vmem:[%s5 + $0x28] sm:$0xff]
  %v71 = vld [vmem:[%s5 + $0x30] sm:$0xff]
  %v72 = vld [vmem:[%s5 + $0x38] sm:$0xff]
  %v73 = vld [vmem:[%s5 + $0x40] sm:$0xff]
  %v74 = vld [vmem:[%s5 + $0x48] sm:$0xff]
  %v75 = vld [vmem:[%s5 + $0x50] sm:$0xff]
  %v76 = vld [vmem:[%s5 + $0x58] sm:$0xff]
  %v77 = vld [vmem:[%s5 + $0x60] sm:$0xff]
  %v78 = vld [vmem:[%s5 + $0x68] sm:$0xff]
  %v79 = vld [vmem:[%s5 + $0x70] sm:$0xff]
  %v80 = vld [vmem:[%s5 + $0x78] sm:$0xff]
  %v81 = vld [vmem:[%s6] sm:$0x1]
  %v83 = vlaneseq
  %v84 = vshrl.u32 %v83, 7
  %v85 = vsub.s32 0, %v84
  %v86 = vrot.slane %v81, %v85
  %88 = vmatprep.subr.mxu0 0.0
  %89 = vmatpush1.msra.mxu0 %v80
  %90 = vmatprep.subr.mxu0 0.0
  %91 = vmatpush1.msra.mxu0 %v79
  %92 = vmatprep.subr.mxu0 0.0
  %93 = vmatpush1.msra.mxu0 %v78
  %94 = vmatprep.subr.mxu0 0.0
  %95 = vmatpush1.msra.mxu0 %v77
  %96 = vmatprep.subr.mxu0 0.0
  %97 = vmatpush1.msra.mxu0 %v76
  %98 = vmatprep.subr.mxu0 0.0
  %99 = vmatpush1.msra.mxu0 %v75
  %100 = vmatprep.subr.mxu0 0.0
  %101 = vmatpush1.msra.mxu0 %v74
  %102 = vmatprep.subr.mxu0 0.0
  %103 = vmatpush1.msra.mxu0 %v73
  %104 = vmatprep.subr.mxu0 0.0
  %105 = vmatpush1.msra.mxu0 %v72
  %106 = vmatprep.subr.mxu0 0.0
  %107 = vmatpush1.msra.mxu0 %v71
  %108 = vmatprep.subr.mxu0 0.0
  %109 = vmatpush1.msra.mxu0 %v70
  %110 = vmatprep.subr.mxu0 0.0
  %111 = vmatpush1.msra.mxu0 %v69
  %112 = vmatprep.subr.mxu0 0.0
  %113 = vmatpush1.msra.mxu0 %v68
  %114 = vmatprep.subr.mxu0 0.0
  %115 = vmatpush1.msra.mxu0 %v67
  %116 = vmatprep.subr.mxu0 0.0
  %117 = vmatpush1.msra.mxu0 %v66
  %118 = vmatprep.subr.mxu0 0.0
  %119 = vmatpush1.msra.mxu0 %v65
  %120 = vmatprep.subr.mxu0 0.0
  %121 = vmatpush2.msra.mxu0 0.0
  %122 = vmatprep.subr.mxu0 0.0
  %123 = vmatpush2.msra.mxu0 0.0
  %124 = vmatprep.subr.mxu0 0.0
  %125 = vmatpush2.msra.mxu0 0.0
  %126 = vmatprep.subr.mxu0 0.0
  %127 = vmatpush2.msra.mxu0 0.0
  %128 = vmatprep.subr.mxu0 0.0
  %129 = vmatpush2.msra.mxu0 0.0
  %130 = vmatprep.subr.mxu0 0.0
  %131 = vmatpush2.msra.mxu0 0.0
  %132 = vmatprep.subr.mxu0 0.0
  %133 = vmatpush2.msra.mxu0 0.0
  %134 = vmatprep.subr.mxu0 0.0
  %135 = vmatpush2.msra.mxu0 0.0
  %136 = vmatprep.subr.mxu0 0.0
  %137 = vmatpush2.msra.mxu0 0.0
  %138 = vmatprep.subr.mxu0 0.0
  %139 = vmatpush2.msra.mxu0 0.0
  %140 = vmatprep.subr.mxu0 0.0
  %141 = vmatpush2.msra.mxu0 0.0
  %142 = vmatprep.subr.mxu0 0.0
  %143 = vmatpush2.msra.mxu0 0.0
  %144 = vmatprep.subr.mxu0 0.0
  %145 = vmatpush2.msra.mxu0 0.0
  %146 = vmatprep.subr.mxu0 0.0
  %147 = vmatpush2.msra.mxu0 0.0
  %148 = vmatprep.subr.mxu0 0.0
  %149 = vmatpush2.msra.mxu0 0.0
  %150 = vmatprep.subr.mxu0 0.0
  %151 = vmatpush2.msra.mxu0 0.0
  %152 = vmatprep.mubr.f32.mxu0 0.0
  %153 = vmatmul.mubr.f32.gmra.mxu0 %v58
  %v154 = vpop.f32.mrf.mxu0
  %v155 = vadd.f32 %v86, %v154
  %v156 = vpop.f32.mrf.mxu0
  %157 = vmatprep.mubr.f32.mxu0 0.0
  %158 = vmatmul.mubr.f32.gmra.mxu0 %v59
  %v159 = vpop.f32.mrf.mxu0
  %v160 = vadd.f32 %v86, %v159
  %v161 = vpop.f32.mrf.mxu0
  %162 = vmatprep.mubr.f32.mxu0 0.0
  %163 = vmatmul.mubr.f32.gmra.mxu0 %v60
  %v164 = vpop.f32.mrf.mxu0
  %v165 = vadd.f32 %v86, %v164
  %v166 = vpop.f32.mrf.mxu0
  %167 = vmatprep.mubr.f32.mxu0 0.0
  %168 = vmatmul.mubr.f32.gmra.mxu0 %v61
  %v169 = vpop.f32.mrf.mxu0
  %v170 = vadd.f32 %v86, %v169
  %v171 = vpop.f32.mrf.mxu0
  %172 = vmatprep.mubr.f32.mxu0 0.0
  %173 = vmatmul.mubr.f32.gmra.mxu0 %v62
  %v174 = vpop.f32.mrf.mxu0
  %v175 = vadd.f32 %v86, %v174
  %v176 = vpop.f32.mrf.mxu0
  %177 = vmatprep.mubr.f32.mxu0 0.0
  %178 = vmatmul.mubr.f32.gmra.mxu0 %v63
  %v179 = vpop.f32.mrf.mxu0
  %v180 = vadd.f32 %v86, %v179
  %v181 = vpop.f32.mrf.mxu0
  %182 = vmatprep.mubr.f32.mxu0 0.0
  %183 = vmatmul.mubr.f32.gmra.mxu0 %v64
  %v184 = vpop.f32.mrf.mxu0
  %v185 = vadd.f32 %v86, %v184
  %v186 = vpop.f32.mrf.mxu0
  %187 = vdwg.mxu0
  %v188 = vmax.f32 %v155, 0.0
  %v189 = vmax.f32 %v160, 0.0
  %v190 = vmax.f32 %v165, 0.0
  %v191 = vmax.f32 %v170, 0.0
  %v192 = vmax.f32 %v175, 0.0
  %v193 = vmax.f32 %v180, 0.0
  %v194 = vmax.f32 %v185, 0.0
  %v195 = vld [vmem:[%s2] sm:$0xff]
  %vm196 = vcmask 457728
  %v198 = vsel %vm196, %v195, 0
  %200 = vmatprep.subr.mxu0 0.0
  %201 = vmatpush1.msra.mxu0 0.0
  %202 = vmatprep.subr.mxu0 0.0
  %203 = vmatpush1.msra.mxu0 0.0
  %204 = vmatprep.subr.mxu0 0.0
  %205 = vmatpush1.msra.mxu0 0.0
  %206 = vmatprep.subr.mxu0 0.0
  %207 = vmatpush1.msra.mxu0 0.0
  %208 = vmatprep.subr.mxu0 0.0
  %209 = vmatpush1.msra.mxu0 0.0
  %210 = vmatprep.subr.mxu0 0.0
  %211 = vmatpush1.msra.mxu0 0.0
  %212 = vmatprep.subr.mxu0 0.0
  %213 = vmatpush1.msra.mxu0 0.0
  %214 = vmatprep.subr.mxu0 0.0
  %215 = vmatpush1.msra.mxu0 0.0
  %216 = vmatprep.subr.mxu0 0.0
  %217 = vmatpush1.msra.mxu0 0.0
  %218 = vmatprep.subr.mxu0 0.0
  %219 = vmatpush1.msra.mxu0 %v194
  %220 = vmatprep.subr.mxu0 0.0
  %221 = vmatpush1.msra.mxu0 %v193
  %222 = vmatprep.subr.mxu0 0.0
  %223 = vmatpush1.msra.mxu0 %v192
  %224 = vmatprep.subr.mxu0 0.0
  %225 = vmatpush1.msra.mxu0 %v191
  %226 = vmatprep.subr.mxu0 0.0
  %227 = vmatpush1.msra.mxu0 %v190
  %228 = vmatprep.subr.mxu0 0.0
  %229 = vmatpush1.msra.mxu0 %v189
  %230 = vmatprep.subr.mxu0 0.0
  %231 = vmatpush1.msra.mxu0 %v188
  %232 = vmatprep.subr.mxu0 0.0
  %233 = vmatpush2.msra.mxu0 0.0
  %234 = vmatprep.subr.mxu0 0.0
  %235 = vmatpush2.msra.mxu0 0.0
  %236 = vmatprep.subr.mxu0 0.0
  %237 = vmatpush2.msra.mxu0 0.0
  %238 = vmatprep.subr.mxu0 0.0
  %239 = vmatpush2.msra.mxu0 0.0
  %240 = vmatprep.subr.mxu0 0.0
  %241 = vmatpush2.msra.mxu0 0.0
  %242 = vmatprep.subr.mxu0 0.0
  %243 = vmatpush2.msra.mxu0 0.0
  %244 = vmatprep.subr.mxu0 0.0
  %245 = vmatpush2.msra.mxu0 0.0
  %246 = vmatprep.subr.mxu0 0.0
  %247 = vmatpush2.msra.mxu0 0.0
  %248 = vmatprep.subr.mxu0 0.0
  %249 = vmatpush2.msra.mxu0 0.0
  %250 = vmatprep.subr.mxu0 0.0
  %251 = vmatpush2.msra.mxu0 0.0
  %252 = vmatprep.subr.mxu0 0.0
  %253 = vmatpush2.msra.mxu0 0.0
  %254 = vmatprep.subr.mxu0 0.0
  %255 = vmatpush2.msra.mxu0 0.0
  %256 = vmatprep.subr.mxu0 0.0
  %257 = vmatpush2.msra.mxu0 0.0
  %258 = vmatprep.subr.mxu0 0.0
  %259 = vmatpush2.msra.mxu0 0.0
  %260 = vmatprep.subr.mxu0 0.0
  %261 = vmatpush2.msra.mxu0 0.0
  %262 = vmatprep.subr.mxu0 0.0
  %263 = vmatpush2.msra.mxu0 0.0
  %264 = vmatprep.mubr.f32.mxu0 0.0
  %265 = vmatmul.mubr.f32.gmra.mxu0 %v198
  %v266 = vpop.f32.mrf.mxu0
  %v267 = vadd.f32 0.0, %v266
  %v268 = vpop.f32.mrf.mxu0
  %269 = vdwg.mxu0
  %v270 = vld [vmem:[%s1] sm:$0xff]
  %v271 = vld [vmem:[%s1 + $0x8] sm:$0xff]
  %v272 = vld [vmem:[%s1 + $0x10] sm:$0xff]
  %v273 = vld [vmem:[%s1 + $0x18] sm:$0xff]
  %v274 = vld [vmem:[%s1 + $0x20] sm:$0xff]
  %v275 = vld [vmem:[%s1 + $0x28] sm:$0xff]
  %v276 = vld [vmem:[%s1 + $0x30] sm:$0xff]
  %v277 = vld [vmem:[%s1 + $0x38] sm:$0xff]
  %v278 = vld [vmem:[%s1 + $0x40] sm:$0xff]
  %v279 = vld [vmem:[%s1 + $0x48] sm:$0xff]
  %v280 = vld [vmem:[%s1 + $0x50] sm:$0xff]
  %v281 = vld [vmem:[%s7] sm:$0xff]
  %v282 = vld [vmem:[%s7 + $0x8] sm:$0xff]
  %v283 = vld [vmem:[%s7 + $0x10] sm:$0xff]
  %v284 = vld [vmem:[%s7 + $0x18] sm:$0xff]
  %v285 = vld [vmem:[%s7 + $0x20] sm:$0xff]
  %v286 = vld [vmem:[%s7 + $0x28] sm:$0xff]
  %v287 = vld [vmem:[%s7 + $0x30] sm:$0xff]
  %v288 = vld [vmem:[%s7 + $0x38] sm:$0xff]
  %v289 = vld [vmem:[%s7 + $0x40] sm:$0xff]
  %v290 = vld [vmem:[%s7 + $0x48] sm:$0xff]
  %v291 = vld [vmem:[%s7 + $0x50] sm:$0xff]
  %v292 = vld [vmem:[%s7 + $0x58] sm:$0xff]
  %v293 = vld [vmem:[%s7 + $0x60] sm:$0xff]
  %v294 = vld [vmem:[%s7 + $0x68] sm:$0xff]
  %v295 = vld [vmem:[%s7 + $0x70] sm:$0xff]
  %v296 = vld [vmem:[%s7 + $0x78] sm:$0xff]
  %v297 = vld [vmem:[%s8] sm:$0x1]
  %v299 = vlaneseq
  %v300 = vshrl.u32 %v299, 7
  %v301 = vsub.s32 0, %v300
  %v302 = vrot.slane %v297, %v301
  %304 = vmatprep.subr.mxu0 0.0
  %305 = vmatpush1.msra.mxu0 %v296
  %306 = vmatprep.subr.mxu0 0.0
  %307 = vmatpush1.msra.mxu0 %v295
  %308 = vmatprep.subr.mxu0 0.0
  %309 = vmatpush1.msra.mxu0 %v294
  %310 = vmatprep.subr.mxu0 0.0
  %311 = vmatpush1.msra.mxu0 %v293
  %312 = vmatprep.subr.mxu0 0.0
  %313 = vmatpush1.msra.mxu0 %v292
  %314 = vmatprep.subr.mxu0 0.0
  %315 = vmatpush1.msra.mxu0 %v291
  %316 = vmatprep.subr.mxu0 0.0
  %317 = vmatpush1.msra.mxu0 %v290
  %318 = vmatprep.subr.mxu0 0.0
  %319 = vmatpush1.msra.mxu0 %v289
  %320 = vmatprep.subr.mxu0 0.0
  %321 = vmatpush1.msra.mxu0 %v288
  %322 = vmatprep.subr.mxu0 0.0
  %323 = vmatpush1.msra.mxu0 %v287
  %324 = vmatprep.subr.mxu0 0.0
  %325 = vmatpush1.msra.mxu0 %v286
  %326 = vmatprep.subr.mxu0 0.0
  %327 = vmatpush1.msra.mxu0 %v285
  %328 = vmatprep.subr.mxu0 0.0
  %329 = vmatpush1.msra.mxu0 %v284
  %330 = vmatprep.subr.mxu0 0.0
  %331 = vmatpush1.msra.mxu0 %v283
  %332 = vmatprep.subr.mxu0 0.0
  %333 = vmatpush1.msra.mxu0 %v282
  %334 = vmatprep.subr.mxu0 0.0
  %335 = vmatpush1.msra.mxu0 %v281
  %336 = vmatprep.subr.mxu0 0.0
  %337 = vmatpush2.msra.mxu0 0.0
  %338 = vmatprep.subr.mxu0 0.0
  %339 = vmatpush2.msra.mxu0 0.0
  %340 = vmatprep.subr.mxu0 0.0
  %341 = vmatpush2.msra.mxu0 0.0
  %342 = vmatprep.subr.mxu0 0.0
  %343 = vmatpush2.msra.mxu0 0.0
  %344 = vmatprep.subr.mxu0 0.0
  %345 = vmatpush2.msra.mxu0 0.0
  %346 = vmatprep.subr.mxu0 0.0
  %347 = vmatpush2.msra.mxu0 0.0
  %348 = vmatprep.subr.mxu0 0.0
  %349 = vmatpush2.msra.mxu0 0.0
  %350 = vmatprep.subr.mxu0 0.0
  %351 = vmatpush2.msra.mxu0 0.0
  %352 = vmatprep.subr.mxu0 0.0
  %353 = vmatpush2.msra.mxu0 0.0
  %354 = vmatprep.subr.mxu0 0.0
  %355 = vmatpush2.msra.mxu0 0.0
  %356 = vmatprep.subr.mxu0 0.0
  %357 = vmatpush2.msra.mxu0 0.0
  %358 = vmatprep.subr.mxu0 0.0
  %359 = vmatpush2.msra.mxu0 0.0
  %360 = vmatprep.subr.mxu0 0.0
  %361 = vmatpush2.msra.mxu0 0.0
  %362 = vmatprep.subr.mxu0 0.0
  %363 = vmatpush2.msra.mxu0 0.0
  %364 = vmatprep.subr.mxu0 0.0
  %365 = vmatpush2.msra.mxu0 0.0
  %366 = vmatprep.subr.mxu0 0.0
  %367 = vmatpush2.msra.mxu0 0.0
  %368 = vmatprep.mubr.f32.mxu0 0.0
  %369 = vmatmul.mubr.f32.gmra.mxu0 %v270
  %v370 = vpop.f32.mrf.mxu0
  %v371 = vadd.f32 %v302, %v370
  %v372 = vpop.f32.mrf.mxu0
  %373 = vmatprep.mubr.f32.mxu0 0.0
  %374 = vmatmul.mubr.f32.gmra.mxu0 %v271
  %v375 = vpop.f32.mrf.mxu0
  %v376 = vadd.f32 %v302, %v375
  %v377 = vpop.f32.mrf.mxu0
  %378 = vmatprep.mubr.f32.mxu0 0.0
  %379 = vmatmul.mubr.f32.gmra.mxu0 %v272
  %v380 = vpop.f32.mrf.mxu0
  %v381 = vadd.f32 %v302, %v380
  %v382 = vpop.f32.mrf.mxu0
  %383 = vmatprep.mubr.f32.mxu0 0.0
  %384 = vmatmul.mubr.f32.gmra.mxu0 %v273
  %v385 = vpop.f32.mrf.mxu0
  %v386 = vadd.f32 %v302, %v385
  %v387 = vpop.f32.mrf.mxu0
  %388 = vmatprep.mubr.f32.mxu0 0.0
  %389 = vmatmul.mubr.f32.gmra.mxu0 %v274
  %v390 = vpop.f32.mrf.mxu0
  %v391 = vadd.f32 %v302, %v390
  %v392 = vpop.f32.mrf.mxu0
  %393 = vmatprep.mubr.f32.mxu0 0.0
  %394 = vmatmul.mubr.f32.gmra.mxu0 %v275
  %v395 = vpop.f32.mrf.mxu0
  %v396 = vadd.f32 %v302, %v395
  %v397 = vpop.f32.mrf.mxu0
  %398 = vmatprep.mubr.f32.mxu0 0.0
  %399 = vmatmul.mubr.f32.gmra.mxu0 %v276
  %v400 = vpop.f32.mrf.mxu0
  %v401 = vadd.f32 %v302, %v400
  %v402 = vpop.f32.mrf.mxu0
  %403 = vmatprep.mubr.f32.mxu0 0.0
  %404 = vmatmul.mubr.f32.gmra.mxu0 %v277
  %v405 = vpop.f32.mrf.mxu0
  %v406 = vadd.f32 %v302, %v405
  %v407 = vpop.f32.mrf.mxu0
  %408 = vmatprep.mubr.f32.mxu0 0.0
  %409 = vmatmul.mubr.f32.gmra.mxu0 %v278
  %v410 = vpop.f32.mrf.mxu0
  %v411 = vadd.f32 %v302, %v410
  %v412 = vpop.f32.mrf.mxu0
  %413 = vmatprep.mubr.f32.mxu0 0.0
  %414 = vmatmul.mubr.f32.gmra.mxu0 %v279
  %v415 = vpop.f32.mrf.mxu0
  %v416 = vadd.f32 %v302, %v415
  %v417 = vpop.f32.mrf.mxu0
  %418 = vmatprep.mubr.f32.mxu0 0.0
  %419 = vmatmul.mubr.f32.gmra.mxu0 %v280
  %v420 = vpop.f32.mrf.mxu0
  %v421 = vadd.f32 %v302, %v420
  %v422 = vpop.f32.mrf.mxu0
  %423 = vdwg.mxu0
  %v424 = vmax.f32 %v371, 0.0
  %v425 = vmax.f32 %v376, 0.0
  %v426 = vmax.f32 %v381, 0.0
  %v427 = vmax.f32 %v386, 0.0
  %v428 = vmax.f32 %v391, 0.0
  %v429 = vmax.f32 %v396, 0.0
  %v430 = vmax.f32 %v401, 0.0
  %v431 = vmax.f32 %v406, 0.0
  %v432 = vmax.f32 %v411, 0.0
  %v433 = vmax.f32 %v416, 0.0
  %v434 = vmax.f32 %v421, 0.0
  %v435 = vld [vmem:[%s3] sm:$0xff]
  %vm436 = vcmask 719872
  %v438 = vsel %vm436, %v435, 0
  %440 = vmatprep.subr.mxu0 0.0
  %441 = vmatpush1.msra.mxu0 0.0
  %442 = vmatprep.subr.mxu0 0.0
  %443 = vmatpush1.msra.mxu0 0.0
  %444 = vmatprep.subr.mxu0 0.0
  %445 = vmatpush1.msra.mxu0 0.0
  %446 = vmatprep.subr.mxu0 0.0
  %447 = vmatpush1.msra.mxu0 0.0
  %448 = vmatprep.subr.mxu0 0.0
  %449 = vmatpush1.msra.mxu0 0.0
  %450 = vmatprep.subr.mxu0 0.0
  %451 = vmatpush1.msra.mxu0 %v434
  %452 = vmatprep.subr.mxu0 0.0
  %453 = vmatpush1.msra.mxu0 %v433
  %454 = vmatprep.subr.mxu0 0.0
  %455 = vmatpush1.msra.mxu0 %v432
  %456 = vmatprep.subr.mxu0 0.0
  %457 = vmatpush1.msra.mxu0 %v431
  %458 = vmatprep.subr.mxu0 0.0
  %459 = vmatpush1.msra.mxu0 %v430
  %460 = vmatprep.subr.mxu0 0.0
  %461 = vmatpush1.msra.mxu0 %v429
  %462 = vmatprep.subr.mxu0 0.0
  %463 = vmatpush1.msra.mxu0 %v428
  %464 = vmatprep.subr.mxu0 0.0
  %465 = vmatpush1.msra.mxu0 %v427
  %466 = vmatprep.subr.mxu0 0.0
  %467 = vmatpush1.msra.mxu0 %v426
  %468 = vmatprep.subr.mxu0 0.0
  %469 = vmatpush1.msra.mxu0 %v425
  %470 = vmatprep.subr.mxu0 0.0
  %471 = vmatpush1.msra.mxu0 %v424
  %472 = vmatprep.subr.mxu0 0.0
  %473 = vmatpush2.msra.mxu0 0.0
  %474 = vmatprep.subr.mxu0 0.0
  %475 = vmatpush2.msra.mxu0 0.0
  %476 = vmatprep.subr.mxu0 0.0
  %477 = vmatpush2.msra.mxu0 0.0
  %478 = vmatprep.subr.mxu0 0.0
  %479 = vmatpush2.msra.mxu0 0.0
  %480 = vmatprep.subr.mxu0 0.0
  %481 = vmatpush2.msra.mxu0 0.0
  %482 = vmatprep.subr.mxu0 0.0
  %483 = vmatpush2.msra.mxu0 0.0
  %484 = vmatprep.subr.mxu0 0.0
  %485 = vmatpush2.msra.mxu0 0.0
  %486 = vmatprep.subr.mxu0 0.0
  %487 = vmatpush2.msra.mxu0 0.0
  %488 = vmatprep.subr.mxu0 0.0
  %489 = vmatpush2.msra.mxu0 0.0
  %490 = vmatprep.subr.mxu0 0.0
  %491 = vmatpush2.msra.mxu0 0.0
  %492 = vmatprep.subr.mxu0 0.0
  %493 = vmatpush2.msra.mxu0 0.0
  %494 = vmatprep.subr.mxu0 0.0
  %495 = vmatpush2.msra.mxu0 0.0
  %496 = vmatprep.subr.mxu0 0.0
  %497 = vmatpush2.msra.mxu0 0.0
  %498 = vmatprep.subr.mxu0 0.0
  %499 = vmatpush2.msra.mxu0 0.0
  %500 = vmatprep.subr.mxu0 0.0
  %501 = vmatpush2.msra.mxu0 0.0
  %502 = vmatprep.subr.mxu0 0.0
  %503 = vmatpush2.msra.mxu0 0.0
  %504 = vmatprep.mubr.f32.mxu0 0.0
  %505 = vmatmul.mubr.f32.gmra.mxu0 %v438
  %v506 = vpop.f32.mrf.mxu0
  %v507 = vadd.f32 0.0, %v506
  %v508 = vpop.f32.mrf.mxu0
  %509 = vdwg.mxu0
  %v510 = vld [vmem:[%s4] sm:$0xff]
  %v511 = vld [vmem:[%s9] sm:$0xff]
  %v512 = vld [vmem:[%s9 + $0x8] sm:$0xff]
  %v513 = vld [vmem:[%s10] sm:$0x1]
  %v515 = vlaneseq
  %v516 = vshrl.u32 %v515, 7
  %v517 = vsub.s32 0, %v516
  %v518 = vrot.slane %v513, %v517
  %vm520 = vcmask 130048
  %v522 = vsel %vm520, %v510, 0
  %524 = vmatprep.subr.mxu0 0.0
  %525 = vmatpush1.msra.mxu0 0.0
  %526 = vmatprep.subr.mxu0 0.0
  %527 = vmatpush1.msra.mxu0 0.0
  %528 = vmatprep.subr.mxu0 0.0
  %529 = vmatpush1.msra.mxu0 0.0
  %530 = vmatprep.subr.mxu0 0.0
  %531 = vmatpush1.msra.mxu0 0.0
  %532 = vmatprep.subr.mxu0 0.0
  %533 = vmatpush1.msra.mxu0 0.0
  %534 = vmatprep.subr.mxu0 0.0
  %535 = vmatpush1.msra.mxu0 0.0
  %536 = vmatprep.subr.mxu0 0.0
  %537 = vmatpush1.msra.mxu0 0.0
  %538 = vmatprep.subr.mxu0 0.0
  %539 = vmatpush1.msra.mxu0 0.0
  %540 = vmatprep.subr.mxu0 0.0
  %541 = vmatpush1.msra.mxu0 0.0
  %542 = vmatprep.subr.mxu0 0.0
  %543 = vmatpush1.msra.mxu0 0.0
  %544 = vmatprep.subr.mxu0 0.0
  %545 = vmatpush1.msra.mxu0 0.0
  %546 = vmatprep.subr.mxu0 0.0
  %547 = vmatpush1.msra.mxu0 0.0
  %548 = vmatprep.subr.mxu0 0.0
  %549 = vmatpush1.msra.mxu0 0.0
  %550 = vmatprep.subr.mxu0 0.0
  %551 = vmatpush1.msra.mxu0 0.0
  %552 = vmatprep.subr.mxu0 0.0
  %553 = vmatpush1.msra.mxu0 %v512
  %554 = vmatprep.subr.mxu0 0.0
  %555 = vmatpush1.msra.mxu0 %v511
  %556 = vmatprep.subr.mxu0 0.0
  %557 = vmatpush2.msra.mxu0 0.0
  %558 = vmatprep.subr.mxu0 0.0
  %559 = vmatpush2.msra.mxu0 0.0
  %560 = vmatprep.subr.mxu0 0.0
  %561 = vmatpush2.msra.mxu0 0.0
  %562 = vmatprep.subr.mxu0 0.0
  %563 = vmatpush2.msra.mxu0 0.0
  %564 = vmatprep.subr.mxu0 0.0
  %565 = vmatpush2.msra.mxu0 0.0
  %566 = vmatprep.subr.mxu0 0.0
  %567 = vmatpush2.msra.mxu0 0.0
  %568 = vmatprep.subr.mxu0 0.0
  %569 = vmatpush2.msra.mxu0 0.0
  %570 = vmatprep.subr.mxu0 0.0
  %571 = vmatpush2.msra.mxu0 0.0
  %572 = vmatprep.subr.mxu0 0.0
  %573 = vmatpush2.msra.mxu0 0.0
  %574 = vmatprep.subr.mxu0 0.0
  %575 = vmatpush2.msra.mxu0 0.0
  %576 = vmatprep.subr.mxu0 0.0
  %577 = vmatpush2.msra.mxu0 0.0
  %578 = vmatprep.subr.mxu0 0.0
  %579 = vmatpush2.msra.mxu0 0.0
  %580 = vmatprep.subr.mxu0 0.0
  %581 = vmatpush2.msra.mxu0 0.0
  %582 = vmatprep.subr.mxu0 0.0
  %583 = vmatpush2.msra.mxu0 0.0
  %584 = vmatprep.subr.mxu0 0.0
  %585 = vmatpush2.msra.mxu0 0.0
  %586 = vmatprep.subr.mxu0 0.0
  %587 = vmatpush2.msra.mxu0 0.0
  %588 = vmatprep.mubr.f32.mxu0 0.0
  %589 = vmatmul.mubr.f32.gmra.mxu0 %v522
  %v590 = vpop.f32.mrf.mxu0
  %v591 = vadd.f32 %v518, %v590
  %v592 = vpop.f32.mrf.mxu0
  %593 = vdwg.mxu0
  %595 = vrot.lane.b32.xlu0 %v507, 64
  %v596 = vpop.permute.xlu0 %595
  %vm598 = vcmask 523264
  %v599 = vsel %vm598, %v267, %v596
  %v600 = vrot.slane %v599, 4
  %v601 = vadd.f32 %v599, %v600
  %v602 = vrot.slane %v601, 2
  %v603 = vadd.f32 %v601, %v602
  %v604 = vrot.slane %v603, 1
  %v605 = vadd.f32 %v603, %v604
  %v606 = vsel %vm598, %v591, 0.0
  %v607 = vrot.slane %v606, 4
  %v608 = vadd.f32 %v606, %v607
  %v609 = vrot.slane %v608, 2
  %v610 = vadd.f32 %v608, %v609
  %v611 = vrot.slane %v610, 1
  %v612 = vadd.f32 %v610, %v611
  %v613 = vrcp.pop 8.0
  %v614 = vmul.f32 %v605, %v613
  %v615 = vmul.f32 %v612, %v613
  %v616 = vsub.f32 %v599, %v614
  %v617 = vsub.f32 %v591, %v615
  %v618 = vmul.f32 %v616, %v616
  %v619 = vmul.f32 %v617, %v617
  %v620 = vrot.slane %v618, 4
  %v621 = vadd.f32 %v618, %v620
  %v622 = vrot.slane %v621, 2
  %v623 = vadd.f32 %v621, %v622
  %v624 = vrot.slane %v623, 1
  %v625 = vadd.f32 %v623, %v624
  %v626 = vsel %vm598, %v619, 0.0
  %v627 = vrot.slane %v626, 4
  %v628 = vadd.f32 %v626, %v627
  %v629 = vrot.slane %v628, 2
  %v630 = vadd.f32 %v628, %v629
  %v631 = vrot.slane %v630, 1
  %v632 = vadd.f32 %v630, %v631
  %v633 = vmul.f32 %v625, %v613
  %v634 = vmul.f32 %v632, %v613
  %v635 = vadd.f32 %v633, 1e-05
  %v636 = vadd.f32 %v634, 1e-05
  %v637 = vrsqrt.pop %v635
  %v638 = vrsqrt.pop %v636
  %v639 = vmul.f32 %v616, %v637
  %v640 = vmul.f32 %v617, %v638
  %v641 = vld [vmem:[%s11] sm:$0x3]
  %v643 = vlaneseq
  %v644 = vshrl.u32 %v643, 7
  %v645 = vsub.s32 0, %v644
  %v646 = vrot.slane %v641, %v645
  %v647 = vlaneseq
  %v648 = vshrl.u32 %v647, 7
  %v649 = vsub.s32 1, %v648
  %v650 = vrot.slane %v641, %v649
  %v653 = vmul.f32 %v639, %v646
  %v654 = vmul.f32 %v640, %v650
  %v655 = vld [vmem:[%s12] sm:$0x3]
  %v657 = vlaneseq
  %v658 = vshrl.u32 %v657, 7
  %v659 = vsub.s32 0, %v658
  %v660 = vrot.slane %v655, %v659
  %v661 = vlaneseq
  %v662 = vshrl.u32 %v661, 7
  %v663 = vsub.s32 1, %v662
  %v664 = vrot.slane %v655, %v663
  %v667 = vadd.f32 %v653, %v660
  %v668 = vadd.f32 %v654, %v664
  %v669 = vld [vmem:[%s13] sm:$0xff]
  %v670 = vld [vmem:[%s13 + $0x8] sm:$0xff]
  %v671 = vld [vmem:[%s13 + $0x10] sm:$0xff]
  %v672 = vld [vmem:[%s13 + $0x18] sm:$0xff]
  %v673 = vld [vmem:[%s13 + $0x20] sm:$0xff]
  %v674 = vld [vmem:[%s13 + $0x28] sm:$0xff]
  %v675 = vld [vmem:[%s13 + $0x30] sm:$0xff]
  %v676 = vld [vmem:[%s13 + $0x38] sm:$0xff]
  %v677 = vld [vmem:[%s13 + $0x40] sm:$0xff]
  %v678 = vld [vmem:[%s13 + $0x48] sm:$0xff]
  %v679 = vld [vmem:[%s13 + $0x50] sm:$0xff]
  %v680 = vld [vmem:[%s13 + $0x58] sm:$0xff]
  %v681 = vld [vmem:[%s13 + $0x60] sm:$0xff]
  %v682 = vld [vmem:[%s13 + $0x68] sm:$0xff]
  %v683 = vld [vmem:[%s13 + $0x70] sm:$0xff]
  %v684 = vld [vmem:[%s13 + $0x78] sm:$0xff]
  %v685 = vld [vmem:[%s13 + $0x80] sm:$0xff]
  %v686 = vld [vmem:[%s13 + $0x88] sm:$0xff]
  %v687 = vld [vmem:[%s13 + $0x90] sm:$0xff]
  %v688 = vld [vmem:[%s13 + $0x98] sm:$0xff]
  %v689 = vld [vmem:[%s13 + $0xa0] sm:$0xff]
  %v690 = vld [vmem:[%s13 + $0xa8] sm:$0xff]
  %v691 = vld [vmem:[%s13 + $0xb0] sm:$0xff]
  %v692 = vld [vmem:[%s13 + $0xb8] sm:$0xff]
  %v693 = vld [vmem:[%s14] sm:$0x1]
  %v695 = vlaneseq
  %v696 = vshrl.u32 %v695, 7
  %v697 = vsub.s32 0, %v696
  %v698 = vrot.slane %v693, %v697
  %v701 = vsel %vm598, %v668, 0
  %703 = vmatprep.subr.mxu0 0.0
  %704 = vmatpush1.msra.mxu0 %v684
  %705 = vmatprep.subr.mxu0 0.0
  %706 = vmatpush1.msra.mxu0 %v683
  %707 = vmatprep.subr.mxu0 0.0
  %708 = vmatpush1.msra.mxu0 %v682
  %709 = vmatprep.subr.mxu0 0.0
  %710 = vmatpush1.msra.mxu0 %v681
  %711 = vmatprep.subr.mxu0 0.0
  %712 = vmatpush1.msra.mxu0 %v680
  %713 = vmatprep.subr.mxu0 0.0
  %714 = vmatpush1.msra.mxu0 %v679
  %715 = vmatprep.subr.mxu0 0.0
  %716 = vmatpush1.msra.mxu0 %v678
  %717 = vmatprep.subr.mxu0 0.0
  %718 = vmatpush1.msra.mxu0 %v677
  %719 = vmatprep.subr.mxu0 0.0
  %720 = vmatpush1.msra.mxu0 %v676
  %721 = vmatprep.subr.mxu0 0.0
  %722 = vmatpush1.msra.mxu0 %v675
  %723 = vmatprep.subr.mxu0 0.0
  %724 = vmatpush1.msra.mxu0 %v674
  %725 = vmatprep.subr.mxu0 0.0
  %726 = vmatpush1.msra.mxu0 %v673
  %727 = vmatprep.subr.mxu0 0.0
  %728 = vmatpush1.msra.mxu0 %v672
  %729 = vmatprep.subr.mxu0 0.0
  %730 = vmatpush1.msra.mxu0 %v671
  %731 = vmatprep.subr.mxu0 0.0
  %732 = vmatpush1.msra.mxu0 %v670
  %733 = vmatprep.subr.mxu0 0.0
  %734 = vmatpush1.msra.mxu0 %v669
  %735 = vmatprep.subr.mxu0 0.0
  %736 = vmatpush2.msra.mxu0 0.0
  %737 = vmatprep.subr.mxu0 0.0
  %738 = vmatpush2.msra.mxu0 0.0
  %739 = vmatprep.subr.mxu0 0.0
  %740 = vmatpush2.msra.mxu0 0.0
  %741 = vmatprep.subr.mxu0 0.0
  %742 = vmatpush2.msra.mxu0 0.0
  %743 = vmatprep.subr.mxu0 0.0
  %744 = vmatpush2.msra.mxu0 0.0
  %745 = vmatprep.subr.mxu0 0.0
  %746 = vmatpush2.msra.mxu0 0.0
  %747 = vmatprep.subr.mxu0 0.0
  %748 = vmatpush2.msra.mxu0 0.0
  %749 = vmatprep.subr.mxu0 0.0
  %750 = vmatpush2.msra.mxu0 0.0
  %751 = vmatprep.subr.mxu0 0.0
  %752 = vmatpush2.msra.mxu0 %v692
  %753 = vmatprep.subr.mxu0 0.0
  %754 = vmatpush2.msra.mxu0 %v691
  %755 = vmatprep.subr.mxu0 0.0
  %756 = vmatpush2.msra.mxu0 %v690
  %757 = vmatprep.subr.mxu0 0.0
  %758 = vmatpush2.msra.mxu0 %v689
  %759 = vmatprep.subr.mxu0 0.0
  %760 = vmatpush2.msra.mxu0 %v688
  %761 = vmatprep.subr.mxu0 0.0
  %762 = vmatpush2.msra.mxu0 %v687
  %763 = vmatprep.subr.mxu0 0.0
  %764 = vmatpush2.msra.mxu0 %v686
  %765 = vmatprep.subr.mxu0 0.0
  %766 = vmatpush2.msra.mxu0 %v685
  %767 = vmatprep.mubr.f32.mxu0 %v701
  %768 = vmatmul.mubr.f32.gmra.mxu0 %v667
  %v769 = vpop.f32.mrf.mxu0
  %v770 = vadd.f32 %v698, %v769
  %v771 = vpop.f32.mrf.mxu0
  %772 = vdwg.mxu0
  %v773 = vld [vmem:[%s15] sm:$0x1]
  %v775 = vlaneseq
  %v776 = vshrl.u32 %v775, 7
  %v777 = vsub.s32 0, %v776
  %v778 = vrot.slane %v773, %v777
  %v780 = vmul.f32 %v770, %v778
  %781 = vadd.xlane.f32.xlu0 %v780
  %v782 = vpop.xlane.xlu0 %781
  %v783 = vld [vmem:[#allocation2] sm:$0x1]
  %v785 = vlaneseq
  %v786 = vshrl.u32 %v785, 7
  %v787 = vsub.s32 0, %v786
  %v788 = vrot.slane %v783, %v787
  %v790 = vadd.f32 %v782, %v788
  %vm791 = vcmask 7168
  %792 = vst.msk [vmem:[%s17] sm:$0xff] %vm791, %v790
  // Predicated region
  $region70: #{three_inputs_net_forward.1} parent=0 // pred_check
    _
  $region71: #{three_inputs_net_forward.1} parent=0 // pred_check_branch
    %794 = sbr.rel (0) target = $region73
  $region72: #{three_inputs_net_forward.1} parent=0 // pred_region
    _
  $region73: #{three_inputs_net_forward.1} parent=0 // pred_fallthru
    _
  // Predicated region
  $region74: #{three_inputs_net_forward.1} parent=0 // pred_check
    _
  $region75: #{three_inputs_net_forward.1} parent=0 // pred_check_branch
    %796 = sbr.rel (0) target = $region77
  $region76: #{three_inputs_net_forward.1} parent=0 // pred_region
    _
  $region77: #{three_inputs_net_forward.1} parent=0 // pred_fallthru
    _

</llo_original>
